<compile_context>
chip_gen: v5e
topology: v5e:2x2
jax: 0.10.0
libtpu: 0.0.40
codegen_flags: <defaults>
</compile_context>

<pallas_src>
import jax
import jax.numpy as jnp
from jax import lax
from jax.experimental import pallas as pl
from jax.experimental.pallas import tpu as pltpu

_LANES = 128
_TARGET_TILE_ROWS = 8192          # (8192, 128) f32 tile = 4 MiB per buffer
_CHUNK_ROWS = 512                 # in-kernel processing slab (512, 128)
_FAST_PATH_MAX_ROWS = 1024        # fused single-block path when rows <= this
_VMEM_LIMIT_BYTES = 32 * 1024 * 1024


def _stream_tile(rows):
    # Only called when rows > _FAST_PATH_MAX_ROWS (= 2 * _CHUNK_ROWS), so the
    # tile is a multiple of _CHUNK_ROWS with  _CHUNK_ROWS*2 <= tile <= rows.
    return min(_TARGET_TILE_ROWS, (rows // _CHUNK_ROWS) * _CHUNK_ROWS)


# ----------------------------------------------------------------------------
# Pallas kernels
# ----------------------------------------------------------------------------
def _ema_fused_kernel(p_ref, ni_ref, x_ref, y_ref, mub_ref, ssb_ref):
    """Fast path: stats + EMA update + normalize in one pass (1R + 1W).

    p_ref  : SMEM f32[8]  [c, mu_biased, sigma_sq_biased, decay, 1-decay,
                           bias_corr, eps, n_f]
    ni_ref : SMEM i32[2]  [n_valid, is_first_step]
    x_ref  : VMEM (R,128) input (any float dtype)
    y_ref  : VMEM (R,128) normalized output (x.dtype)
    mub_ref, ssb_ref : VMEM (1,1) f32 updated biased statistics.
    """
    c = p_ref[0]
    decay = p_ref[3]
    omd = p_ref[4]
    bias_corr = p_ref[5]
    eps = p_ref[6]
    n_f = p_ref[7]

    x = x_ref[...].astype(jnp.float32)
    rows = x.shape[0]
    gidx = (lax.broadcasted_iota(jnp.int32, (rows, _LANES), 0) * _LANES
            + lax.broadcasted_iota(jnp.int32, (rows, _LANES), 1))
    # Masked elements contribute exactly zero to the centered moments.
    xc = jnp.where(gidx < ni_ref[0], x, c) - c

    s1 = jnp.sum(jnp.sum(xc, axis=0, keepdims=True), axis=1, keepdims=True)
    s2 = jnp.sum(jnp.sum(xc * xc, axis=0, keepdims=True), axis=1, keepdims=True)

    # EMA scalar update, kept as (1,1) vector math (EUP rsqrt, VPU arith).
    x_mean = c + s1 / n_f
    mu_b = jnp.full((1, 1), p_ref[1]) * decay + x_mean * omd
    new_mu = mu_b / bias_corr
    prev_mu = jnp.where(ni_ref[1] == 1, new_mu, jnp.full((1, 1), c))
    a = prev_mu - c
    b = new_mu - c
    #   sum((x - prev_mu)(x - new_mu)) = s2 - (a + b) s1 + n a b
    ssq_new = (s2 - (a + b) * s1 + (a * b) * n_f) / n_f
    ssb = jnp.full((1, 1), p_ref[2]) * decay + ssq_new * omd
    sigma_sq = ssb / bias_corr
    inv_sigma = lax.rsqrt(jnp.maximum(sigma_sq, eps))
    shift = new_mu * inv_sigma

    y_ref[...] = (x * inv_sigma - shift).astype(y_ref.dtype)
    mub_ref[...] = mu_b
    ssb_ref[...] = ssb


def _ema_stats_kernel(c_ref, n_ref, x_ref, s1_ref, s2_ref):
    """Streaming path, pass 1: accumulate centered moments over one tile.

    c_ref  : SMEM f32[1]       centering constant
    n_ref  : SMEM i32[1]       number of valid elements in the flat input
    x_ref  : VMEM (tile,128)   input tile (possibly a partial / clamped block)
    s1/s2  : VMEM (8,128) f32  per-(sublane, lane) accumulators, resident
                               across the "arbitrary" grid axis 1.
    """
    i = pl.program_id(1)

    @pl.when(i == 0)
    def _init():
        s1_ref[...] = jnp.zeros_like(s1_ref)
        s2_ref[...] = jnp.zeros_like(s2_ref)

    c = c_ref[0]
    n_valid = n_ref[0]
    tile_rows = x_ref.shape[0]
    n_chunks = tile_rows // _CHUNK_ROWS
    # Logical (unclamped) block index: a duplicate clamped block (odd block
    # count split over 2 cores) gets indices >= n_valid and masks to zero.
    block = pl.program_id(0) * pl.num_programs(1) + i
    row0 = block * tile_rows

    base_idx = (lax.broadcasted_iota(jnp.int32, (_CHUNK_ROWS, _LANES), 0)
                * _LANES
                + lax.broadcasted_iota(jnp.int32, (_CHUNK_ROWS, _LANES), 1))

    def body(ci, carry):
        s1, s2 = carry
        r = pl.multiple_of(ci * _CHUNK_ROWS, _CHUNK_ROWS)
        xch = x_ref[pl.ds(r, _CHUNK_ROWS), :].astype(jnp.float32)
        gidx = base_idx + (row0 + r) * _LANES
        xc = jnp.where(gidx < n_valid, xch, c) - c
        xc3 = xc.reshape(_CHUNK_ROWS // 8, 8, _LANES)
        return s1 + jnp.sum(xc3, axis=0), s2 + jnp.sum(xc3 * xc3, axis=0)

    zero = jnp.zeros((8, _LANES), jnp.float32)
    s1, s2 = lax.fori_loop(0, n_chunks, body, (zero, zero), unroll=True)
    s1_ref[...] += s1
    s2_ref[...] += s2


def _ema_affine_kernel(p_ref, x_ref, y_ref):
    """Streaming path, pass 2: y = x * p[0] - p[1], chunked over the tile."""
    scale = p_ref[0]
    shift = p_ref[1]
    n_chunks = x_ref.shape[0] // _CHUNK_ROWS

    def body(ci, carry):
        r = pl.multiple_of(ci * _CHUNK_ROWS, _CHUNK_ROWS)
        xch = x_ref[pl.ds(r, _CHUNK_ROWS), :].astype(jnp.float32)
        y_ref[pl.ds(r, _CHUNK_ROWS), :] = (xch * scale - shift).astype(y_ref.dtype)
        return carry

    lax.fori_loop(0, n_chunks, body, 0, unroll=True)


def _ema_affine_small_kernel(p_ref, x_ref, y_ref):
    """Whole-array (single block) y = x * p[0] - p[1] for small inputs."""
    x = x_ref[...].astype(jnp.float32)
    y_ref[...] = (x * p_ref[0] - p_ref[1]).astype(y_ref.dtype)


# ----------------------------------------------------------------------------
# Layout helpers (trace-time)
# ----------------------------------------------------------------------------
def _to_2d(x):
    """Reshape x to (rows, 128).  Pads only when x.size % 128 != 0."""
    n = x.size
    flat = x.reshape(-1)
    rem = n % _LANES
    if rem:
        flat = jnp.pad(flat, (0, _LANES - rem))
    return flat.reshape(-1, _LANES), bool(rem)


def _from_2d(y2d, shape, n, padded):
    if padded:
        return y2d.reshape(-1)[:n].reshape(shape)
    return y2d.reshape(shape)


def _affine_stream(params, x2d, tile, out_dtype):
    rows = x2d.shape[0]
    return pl.pallas_call(
        _ema_affine_kernel,
        out_shape=jax.ShapeDtypeStruct(x2d.shape, out_dtype),
        grid=(pl.cdiv(rows, tile),),
        in_specs=[
            pl.BlockSpec(memory_space=pltpu.MemorySpace.SMEM),
            pl.BlockSpec((tile, _LANES), lambda i: (i, 0)),
        ],
        out_specs=pl.BlockSpec((tile, _LANES), lambda i: (i, 0)),
        compiler_params=pltpu.CompilerParams(
            dimension_semantics=("parallel",),
            vmem_limit_bytes=_VMEM_LIMIT_BYTES),
    )(params, x2d)


def _affine_dispatch(params, x):
    n = x.size
    x2d, padded = _to_2d(x)
    rows = x2d.shape[0]
    if rows <= _FAST_PATH_MAX_ROWS:
        y2d = pl.pallas_call(
            _ema_affine_small_kernel,
            out_shape=jax.ShapeDtypeStruct(x2d.shape, x.dtype),
            in_specs=[pl.BlockSpec(memory_space=pltpu.MemorySpace.SMEM),
                      pl.BlockSpec(memory_space=pltpu.MemorySpace.VMEM)],
            out_specs=pl.BlockSpec(memory_space=pltpu.MemorySpace.VMEM),
            compiler_params=pltpu.CompilerParams(
                vmem_limit_bytes=_VMEM_LIMIT_BYTES),
        )(params, x2d)
    else:
        y2d = _affine_stream(params, x2d, _stream_tile(rows), x.dtype)
    return _from_2d(y2d, x.shape, n, padded)


# ----------------------------------------------------------------------------
# Jitted steps
# ----------------------------------------------------------------------------
@jax.jit
def _ema_train_step(state, x):
    n = x.size
    x2d, padded = _to_2d(x)
    rows = x2d.shape[0]

    decay = state["decay"]
    omd = state["one_minus_decay"]
    n_new = state["N"] + 1
    bias_corr = -jnp.expm1(n_new.astype(jnp.float32) * jnp.log(decay))
    n_f = jnp.float32(n)

    # Centering constant for the one-pass moments: previous EMA mean, except on
    # the very first step (mu == 0) where a cheap estimate (mean of the first
    # <=128 elements) avoids catastrophic cancellation when |mean| >> std.
    flat = x.reshape(-1)
    c0 = jnp.mean(flat[: min(n, _LANES)].astype(jnp.float32))
    c = jnp.where(state["N"] == 0, c0, state["mu"])

    if rows <= _FAST_PATH_MAX_ROWS:
        # ---- fused single-block fast path (1R + 1W, one launch) -----------
        params = jnp.stack([c, state["mu_biased"], state["sigma_sq_biased"],
                            decay, omd, bias_corr, state["eps"], n_f])
        ni = jnp.stack([jnp.int32(n),
                        (state["N"] == 0).astype(jnp.int32)])
        y2d, mu_b, ssb = pl.pallas_call(
            _ema_fused_kernel,
            out_shape=(jax.ShapeDtypeStruct(x2d.shape, x.dtype),
                       jax.ShapeDtypeStruct((1, 1), jnp.float32),
                       jax.ShapeDtypeStruct((1, 1), jnp.float32)),
            in_specs=[pl.BlockSpec(memory_space=pltpu.MemorySpace.SMEM),
                      pl.BlockSpec(memory_space=pltpu.MemorySpace.SMEM),
                      pl.BlockSpec(memory_space=pltpu.MemorySpace.VMEM)],
            out_specs=(pl.BlockSpec(memory_space=pltpu.MemorySpace.VMEM),
                       pl.BlockSpec(memory_space=pltpu.MemorySpace.VMEM),
                       pl.BlockSpec(memory_space=pltpu.MemorySpace.VMEM)),
            compiler_params=pltpu.CompilerParams(
                vmem_limit_bytes=_VMEM_LIMIT_BYTES),
        )(params, ni, x2d)
        mu_biased = mu_b[0, 0]
        sigma_sq_biased = ssb[0, 0]
        new_mu = mu_biased / bias_corr
        sigma_sq = sigma_sq_biased / bias_corr
        inv_sigma = lax.rsqrt(jnp.maximum(sigma_sq, state["eps"]))
        sigma = 1.0 / inv_sigma
    else:
        # ---- streaming two-pass path ---------------------------------------
        tile = _stream_tile(rows)
        total_blocks = pl.cdiv(rows, tile)
        split = 2 if total_blocks >= 2 else 1       # 2-TC sharding on v7x
        inner = -(-total_blocks // split)
        last = total_blocks - 1

        c_arr = jnp.reshape(c, (1,))
        n_arr = jnp.full((1,), n, jnp.int32)
        part_shape = jax.ShapeDtypeStruct((split * 8, _LANES), jnp.float32)
        s1_part, s2_part = pl.pallas_call(
            _ema_stats_kernel,
            out_shape=(part_shape, part_shape),
            grid=(split, inner),
            in_specs=[
                pl.BlockSpec(memory_space=pltpu.MemorySpace.SMEM),
                pl.BlockSpec(memory_space=pltpu.MemorySpace.SMEM),
                # Clamp so a duplicate trailing block stays in-bounds; the
                # kernel masks its (logical) indices to a zero contribution.
                pl.BlockSpec((tile, _LANES),
                             lambda cc, i: (jnp.minimum(cc * inner + i, last), 0)),
            ],
            out_specs=(
                pl.BlockSpec((8, _LANES), lambda cc, i: (cc, 0)),
                pl.BlockSpec((8, _LANES), lambda cc, i: (cc, 0)),
            ),
            compiler_params=pltpu.CompilerParams(
                dimension_semantics=("parallel", "arbitrary"),
                vmem_limit_bytes=_VMEM_LIMIT_BYTES),
        )(c_arr, n_arr, x2d)
        s1 = jnp.sum(s1_part)
        s2 = jnp.sum(s2_part)

        # scalar EMA state update (fused XLA scalar ops)
        x_mean = c + s1 / n_f
        mu_biased = state["mu_biased"] * decay + x_mean * omd
        new_mu = mu_biased / bias_corr
        prev_mu = jnp.where(state["N"] == 0, new_mu, state["mu"])
        a = prev_mu - c
        b = new_mu - c
        sigma_sq_new = (s2 - (a + b) * s1 + n_f * a * b) / n_f
        sigma_sq_biased = state["sigma_sq_biased"] * decay + sigma_sq_new * omd
        sigma_sq = sigma_sq_biased / bias_corr
        inv_sigma = lax.rsqrt(jnp.maximum(sigma_sq, state["eps"]))
        sigma = 1.0 / inv_sigma

        params = jnp.stack([inv_sigma, new_mu * inv_sigma])
        y2d = _affine_stream(params, x2d, tile, x.dtype)

    y = _from_2d(y2d, x.shape, n, padded)
    new_state = dict(state, mu=new_mu, inv_sigma=inv_sigma, sigma=sigma,
                     mu_biased=mu_biased, sigma_sq_biased=sigma_sq_biased,
                     N=n_new)
    return new_state, y


@jax.jit
def _ema_apply_step(state, x):
    params = jnp.stack([state["inv_sigma"], state["mu"] * state["inv_sigma"]])
    return _affine_dispatch(params, x)


@jax.jit
def _ema_invert_step(state, x):
    params = jnp.stack([state["sigma"], -state["mu"]])      # x*sigma + mu
    return _affine_dispatch(params, x)


# ----------------------------------------------------------------------------
# Module wrapper
# ----------------------------------------------------------------------------
class EMANormalizer:
    """Pallas/JAX port of the PyTorch EMANormalizer forward pass."""

    def __init__(self, decay, eps=1e-5, disable=False):
        self.disable = disable
        if disable:
            return
        decay_f32 = jnp.float32(decay)
        self.state = {
            "mu": jnp.float32(0.0),
            "inv_sigma": jnp.float32(0.0),
            "sigma": jnp.float32(0.0),
            "decay": decay_f32,
            "one_minus_decay": jnp.float32(1.0) - decay_f32,
            "mu_biased": jnp.float32(0.0),
            "sigma_sq_biased": jnp.float32(0.0),
            "eps": jnp.float32(eps),
            "N": jnp.int32(0),
        }

    # amp.disable() has no JAX equivalent: statistics are always f32 in-kernel.
    def forward(self, x, training=True):
        if self.disable:
            return x
        if training:
            self.state, y = _ema_train_step(self.state, x)
            return y
        return _ema_apply_step(self.state, x)

    def invert(self, normalized_x):
        if self.disable:
            return normalized_x
        return _ema_invert_step(self.state, normalized_x)

    # buffer-style accessors (parity with the torch module)
    @property
    def mu(self): return self.state["mu"]
    @property
    def inv_sigma(self): return self.state["inv_sigma"]
    @property
    def sigma(self): return self.state["sigma"]
    @property
    def mu_biased(self): return self.state["mu_biased"]
    @property
    def sigma_sq_biased(self): return self.state["sigma_sq_biased"]
    @property
    def N(self): return self.state["N"]


# ----------------------------------------------------------------------------
# Pure-JAX reference (mirrors the PyTorch semantics exactly)
# ----------------------------------------------------------------------------
class RefEMANormalizer:
    def __init__(self, decay, eps=1e-5):
        self.eps = jnp.float32(eps)
        self.decay = jnp.float32(decay)
        self.one_minus_decay = jnp.float32(1.0) - self.decay
        self.mu = jnp.float32(0.0)
        self.inv_sigma = jnp.float32(0.0)
        self.sigma = jnp.float32(0.0)
        self.mu_biased = jnp.float32(0.0)
        self.sigma_sq_biased = jnp.float32(0.0)
        self.N = jnp.int32(0)

    def forward(self, x, training=True):
        x_f32 = x.astype(jnp.float32)
        if training:
            self.N = self.N + 1
            bias_correction = -jnp.expm1(
                self.N.astype(jnp.float32) * jnp.log(self.decay))
            self.mu_biased = self.mu_biased * self.decay \
                + jnp.mean(x_f32) * self.one_minus_decay
            new_mu = self.mu_biased / bias_correction
            prev_mu = jnp.where(self.N == 1, new_mu, self.mu)
            sigma_sq_new = jnp.mean((x_f32 - prev_mu) * (x_f32 - new_mu))
            self.sigma_sq_biased = self.sigma_sq_biased * self.decay \
                + sigma_sq_new * self.one_minus_decay
            sigma_sq = self.sigma_sq_biased / bias_correction
            self.mu = new_mu
            self.inv_sigma = lax.rsqrt(jnp.maximum(sigma_sq, self.eps))
            self.sigma = 1.0 / self.inv_sigma
        return ((-self.mu * self.inv_sigma)
                + x_f32 * self.inv_sigma).astype(x.dtype)

    def invert(self, normalized_x):
        return (self.mu + normalized_x.astype(jnp.float32)
                * self.sigma).astype(normalized_x.dtype)


# ----------------------------------------------------------------------------
if __name__ == "__main__":
    key = jax.random.PRNGKey(0)
    ks = jax.random.split(key, 5)
    # Small NCHW-shaped inputs (fast fused path).
    x1 = jax.random.normal(ks[0], (2, 4, 16, 16), jnp.float32) * 3.0 + 1.5
    x2 = jax.random.normal(ks[1], (2, 4, 16, 16), jnp.float32) * 0.5 - 2.0
    # Ragged shape (exercises the masked pad path in the fused kernel).
    x3 = jax.random.normal(ks[2], (3, 5, 7), jnp.float32) * 2.0 + 0.25
    # Moderate sizes that exercise the streaming two-pass path
    # (tiled stats grid + partial blocks + chunked fori bodies).
    x4 = jax.random.normal(ks[3], (160, 1024), jnp.float32) * 1.7 - 0.3
    x5 = jax.random.normal(ks[4], (131149,), jnp.float32) * 0.8 + 4.0

    norm = EMANormalizer(decay=0.99, eps=1e-5)
    ref = RefEMANormalizer(decay=0.99, eps=1e-5)

    ok = True
    for x in (x1, x2, x3, x4, x5):
        y = jax.block_until_ready(norm.forward(x, training=True))
        y_ref = ref.forward(x, training=True)
        ok &= bool(jnp.allclose(y, y_ref, rtol=1e-4, atol=1e-4))
        for a, b in [(norm.mu, ref.mu), (norm.inv_sigma, ref.inv_sigma),
                     (norm.sigma, ref.sigma), (norm.mu_biased, ref.mu_biased),
                     (norm.sigma_sq_biased, ref.sigma_sq_biased)]:
            ok &= bool(jnp.allclose(a, b, rtol=1e-4, atol=1e-5))

    # Eval-mode (apply-only) and invert paths, small + streaming sizes.
    for x in (x1, x4):
        y_eval = jax.block_until_ready(norm.forward(x, training=False))
        y_eval_ref = ref.forward(x, training=False)
        ok &= bool(jnp.allclose(y_eval, y_eval_ref, rtol=1e-4, atol=1e-4))
        x_back = jax.block_until_ready(norm.invert(y_eval))
        x_back_ref = ref.invert(y_eval)
        ok &= bool(jnp.allclose(x_back, x_back_ref, rtol=1e-4, atol=1e-4))

    print("KERNEL_OK" if ok else "KERNEL_MISMATCH")
</pallas_src>

<mosaic_0001>
module attributes {stable_mosaic.version = 11 : i64} {
  func.func @_ema_fused_kernel(%arg0: memref<8xf32, #tpu.memory_space<smem>>, %arg1: memref<2xi32, #tpu.memory_space<smem>>, %arg2: memref<16x128xf32, #tpu.memory_space<vmem>>, %arg3: memref<16x128xf32, #tpu.memory_space<vmem>>, %arg4: memref<1x1xf32, #tpu.memory_space<vmem>>, %arg5: memref<1x1xf32, #tpu.memory_space<vmem>>) attributes {dimension_semantics = [], scalar_prefetch = 0 : i64, scratch_operands = 0 : i64, tpu.core_type = #tpu.core_type<tc>} {
    %c0 = arith.constant 0 : index
    %0 = memref.load %arg0[%c0] : memref<8xf32, #tpu.memory_space<smem>>
    %c3 = arith.constant 3 : index
    %1 = memref.load %arg0[%c3] : memref<8xf32, #tpu.memory_space<smem>>
    %c4 = arith.constant 4 : index
    %2 = memref.load %arg0[%c4] : memref<8xf32, #tpu.memory_space<smem>>
    %c5 = arith.constant 5 : index
    %3 = memref.load %arg0[%c5] : memref<8xf32, #tpu.memory_space<smem>>
    %c6 = arith.constant 6 : index
    %4 = memref.load %arg0[%c6] : memref<8xf32, #tpu.memory_space<smem>>
    %c7 = arith.constant 7 : index
    %5 = memref.load %arg0[%c7] : memref<8xf32, #tpu.memory_space<smem>>
    %c0_0 = arith.constant 0 : index
    %c0_1 = arith.constant 0 : index
    %6 = vector.load %arg2[%c0_0, %c0_1] : memref<16x128xf32, #tpu.memory_space<vmem>>, vector<16x128xf32>
    %7 = tpu.iota {dimensions = array<i32: 0>} : vector<16x128xi32>
    %c128_i32 = arith.constant 128 : i32
    %8 = vector.broadcast %c128_i32 : i32 to vector<16x128xi32>
    %9 = arith.muli %7, %8 : vector<16x128xi32>
    %10 = tpu.iota {dimensions = array<i32: 1>} : vector<16x128xi32>
    %11 = arith.addi %9, %10 : vector<16x128xi32>
    %c0_2 = arith.constant 0 : index
    %12 = memref.load %arg1[%c0_2] : memref<2xi32, #tpu.memory_space<smem>>
    %13 = vector.broadcast %12 : i32 to vector<16x128xi32>
    %14 = arith.cmpi slt, %11, %13 : vector<16x128xi32>
    %15 = vector.broadcast %0 : f32 to vector<16x128xf32>
    %16 = arith.select %14, %6, %15 : vector<16x128xi1>, vector<16x128xf32>
    %17 = vector.broadcast %0 : f32 to vector<16x128xf32>
    %18 = arith.subf %16, %17 : vector<16x128xf32>
    %cst = arith.constant dense<0.000000e+00> : vector<128xf32>
    %19 = vector.multi_reduction <add>, %18, %cst [0] : vector<16x128xf32> to vector<128xf32>
    %20 = vector.shape_cast %19 : vector<128xf32> to vector<1x128xf32>
    %cst_3 = arith.constant dense<0.000000e+00> : vector<1xf32>
    %21 = vector.multi_reduction <add>, %20, %cst_3 [1] : vector<1x128xf32> to vector<1xf32>
    %22 = vector.shape_cast %21 : vector<1xf32> to vector<1x1xf32>
    %23 = arith.mulf %18, %18 : vector<16x128xf32>
    %cst_4 = arith.constant dense<0.000000e+00> : vector<128xf32>
    %24 = vector.multi_reduction <add>, %23, %cst_4 [0] : vector<16x128xf32> to vector<128xf32>
    %25 = vector.shape_cast %24 : vector<128xf32> to vector<1x128xf32>
    %cst_5 = arith.constant dense<0.000000e+00> : vector<1xf32>
    %26 = vector.multi_reduction <add>, %25, %cst_5 [1] : vector<1x128xf32> to vector<1xf32>
    %27 = vector.shape_cast %26 : vector<1xf32> to vector<1x1xf32>
    %28 = vector.broadcast %5 : f32 to vector<1x1xf32>
    %29 = arith.divf %22, %28 : vector<1x1xf32>
    %30 = vector.broadcast %0 : f32 to vector<1x1xf32>
    %31 = arith.addf %30, %29 : vector<1x1xf32>
    %c1 = arith.constant 1 : index
    %32 = memref.load %arg0[%c1] : memref<8xf32, #tpu.memory_space<smem>>
    %33 = vector.broadcast %32 : f32 to vector<1x1xf32>
    %34 = vector.broadcast %1 : f32 to vector<1x1xf32>
    %35 = arith.mulf %33, %34 : vector<1x1xf32>
    %36 = vector.broadcast %2 : f32 to vector<1x1xf32>
    %37 = arith.mulf %31, %36 : vector<1x1xf32>
    %38 = arith.addf %35, %37 : vector<1x1xf32>
    %39 = vector.broadcast %3 : f32 to vector<1x1xf32>
    %40 = arith.divf %38, %39 : vector<1x1xf32>
    %c1_6 = arith.constant 1 : index
    %41 = memref.load %arg1[%c1_6] : memref<2xi32, #tpu.memory_space<smem>>
    %c1_i32 = arith.constant 1 : i32
    %42 = arith.cmpi eq, %41, %c1_i32 : i32
    %43 = vector.broadcast %0 : f32 to vector<1x1xf32>
    %44 = arith.select %42, %40, %43 : vector<1x1xf32>
    %45 = vector.broadcast %0 : f32 to vector<1x1xf32>
    %46 = arith.subf %44, %45 : vector<1x1xf32>
    %47 = vector.broadcast %0 : f32 to vector<1x1xf32>
    %48 = arith.subf %40, %47 : vector<1x1xf32>
    %49 = arith.addf %46, %48 : vector<1x1xf32>
    %50 = arith.mulf %49, %22 : vector<1x1xf32>
    %51 = arith.subf %27, %50 : vector<1x1xf32>
    %52 = arith.mulf %46, %48 : vector<1x1xf32>
    %53 = vector.broadcast %5 : f32 to vector<1x1xf32>
    %54 = arith.mulf %52, %53 : vector<1x1xf32>
    %55 = arith.addf %51, %54 : vector<1x1xf32>
    %56 = vector.broadcast %5 : f32 to vector<1x1xf32>
    %57 = arith.divf %55, %56 : vector<1x1xf32>
    %c2 = arith.constant 2 : index
    %58 = memref.load %arg0[%c2] : memref<8xf32, #tpu.memory_space<smem>>
    %59 = vector.broadcast %58 : f32 to vector<1x1xf32>
    %60 = vector.broadcast %1 : f32 to vector<1x1xf32>
    %61 = arith.mulf %59, %60 : vector<1x1xf32>
    %62 = vector.broadcast %2 : f32 to vector<1x1xf32>
    %63 = arith.mulf %57, %62 : vector<1x1xf32>
    %64 = arith.addf %61, %63 : vector<1x1xf32>
    %65 = vector.broadcast %3 : f32 to vector<1x1xf32>
    %66 = arith.divf %64, %65 : vector<1x1xf32>
    %67 = vector.broadcast %4 : f32 to vector<1x1xf32>
    %68 = arith.maximumf %66, %67 : vector<1x1xf32>
    %69 = math.rsqrt %68 : vector<1x1xf32>
    %70 = arith.mulf %40, %69 : vector<1x1xf32>
    %71 = vector.broadcast %69 : vector<1x1xf32> to vector<16x128xf32>
    %72 = arith.mulf %6, %71 : vector<16x128xf32>
    %73 = vector.broadcast %70 : vector<1x1xf32> to vector<16x128xf32>
    %74 = arith.subf %72, %73 : vector<16x128xf32>
    %c0_7 = arith.constant 0 : index
    %c0_8 = arith.constant 0 : index
    %75 = vector.load %arg3[%c0_7, %c0_8] : memref<16x128xf32, #tpu.memory_space<vmem>>, vector<16x128xf32>
    tpu.vector_store %arg3[%c0_7, %c0_8], %74 {strides = array<i32>} : memref<16x128xf32, #tpu.memory_space<vmem>>, vector<16x128xf32>,
    %c0_9 = arith.constant 0 : index
    %c0_10 = arith.constant 0 : index
    %76 = vector.load %arg4[%c0_9, %c0_10] : memref<1x1xf32, #tpu.memory_space<vmem>>, vector<1x1xf32>
    tpu.vector_store %arg4[%c0_9, %c0_10], %38 {strides = array<i32>} : memref<1x1xf32, #tpu.memory_space<vmem>>, vector<1x1xf32>,
    %c0_11 = arith.constant 0 : index
    %c0_12 = arith.constant 0 : index
    %77 = vector.load %arg5[%c0_11, %c0_12] : memref<1x1xf32, #tpu.memory_space<vmem>>, vector<1x1xf32>
    tpu.vector_store %arg5[%c0_11, %c0_12], %64 {strides = array<i32>} : memref<1x1xf32, #tpu.memory_space<vmem>>, vector<1x1xf32>,
    return
  }
}

</mosaic_0001>

<llo_original>
// kernel: _ema_train_step.1
$region0: #{_ema_train_step.1}
  #allocation0 [shape = 'u32[]', space=smem, size = 0x4, offset = 0x4, fixed_abs, tag = 'smem constant byte address 0x4 - core index']
  #allocation1 [shape = 'u32[72,128]{1,0:T(1,128)}', space=vmem, size = 0x9000, scoped, tag = 'internal scratch']
  %s0 = inlined_call_operand.vmem [shape: f32[8], index: 0, kind: input, shape index: {}]
  %s1 = inlined_call_operand.vmem [shape: s32[2], index: 1, kind: input, shape index: {}]
  %s2 = inlined_call_operand.vmem [shape: f32[16,128], index: 2, kind: input, shape index: {}]
  %s3 = inlined_call_operand.vmem [shape: f32[16,128], index: 3, kind: output, shape index: {0}]
  %s4 = inlined_call_operand.hbm [shape: f32[1,1], index: 4, kind: output, shape index: {1}]
  %s5 = inlined_call_operand.hbm [shape: f32[1,1], index: 5, kind: output, shape index: {2}]
  %6 = xla_tuple %s3, %s4, %s5
  %s7 = sld [smem:[#allocation0]]
  $region46: #{_ema_train_step.1} parent=0
    _
  %s9 = ssub.s32 1, %s7
  %s10 = scalar_select 0, %s9, %s7
  $region1: #{_ema_train_step.1} parent=0
    #allocation2 [shape = 'u8[512]{0}', space=smem, size = 0x200, scoped, tag = 'input window, operand 0, single buffered']
    #allocation3 [shape = 's32[1]{0}', space=sflag, size = 0x4, scoped, tag = 'scoped memory for _ema_train_step.1']
    #allocation4 [shape = 's32[1]{0}', space=sflag, size = 0x4, scoped, tag = 'scoped memory for _ema_train_step.1']
    #allocation5 [shape = 'u8[512]{0}', space=smem, size = 0x200, scoped, tag = 'input window, operand 1, single buffered']
    #allocation6 [shape = 's32[1]{0}', space=sflag, size = 0x4, scoped, tag = 'scoped memory for _ema_train_step.1']
    #allocation7 [shape = 'u8[512]{0}', space=vmem, size = 0x400, scoped, tag = 'output window, operand 1, single buffered']
    #allocation8 [shape = 'u8[512]{0}', space=vmem, size = 0x400, scoped, tag = 'output window, operand 2, single buffered']
    #allocation9 [shape = 's32[1]{0}', space=sflag, size = 0x4, scoped, tag = 'scoped memory for _ema_train_step.1']
    %11 = vsyncpa [#allocation4], 0
    %12 = vsyncpa [#allocation6], 0
    %13 = vsyncpa [#allocation3], 0
    %14 = vsyncpa [#allocation9], 0
    // Predicated region
    $region2: #{_ema_train_step.1} parent=1 // pred_check
      _
    $region3: #{_ema_train_step.1} parent=1 // pred_check_branch
      %16 = sbr.rel (0) target = $region5
    $region4: #{_ema_train_step.1} parent=1 // pred_region
      %18 = vsyncadd [#allocation4], 0
      %s20 = sshll.u32 %s0, 4
      %s21 = int_to_ptr.vmem [resolvable:$true] %s20
      %23 = dma.vmem_to_smem %s21, 16, [#allocation2], [#allocation4]
    $region5: #{_ema_train_step.1} parent=1 // pred_fallthru
      _
    // Predicated region
    $region6: #{_ema_train_step.1} parent=1 // pred_check
      _
    $region7: #{_ema_train_step.1} parent=1 // pred_check_branch
      %25 = sbr.rel (0) target = $region9
    $region8: #{_ema_train_step.1} parent=1 // pred_region
      %27 = vsyncadd [#allocation6], 0
      %s29 = sshll.u32 %s1, 4
      %s30 = int_to_ptr.vmem [resolvable:$true] %s29
      %32 = dma.vmem_to_smem %s30, 16, [#allocation5], [#allocation6]
    $region9: #{_ema_train_step.1} parent=1 // pred_fallthru
      _
    // Predicated region
    $region10: #{_ema_train_step.1} parent=1 // pred_check
      _
    $region11: #{_ema_train_step.1} parent=1 // pred_check_branch
      %34 = sbr.rel (0) target = $region13
    $region12: #{_ema_train_step.1} parent=1 // pred_region
      _
    $region13: #{_ema_train_step.1} parent=1 // pred_fallthru
      _
    // Predicated region
    $region14: #{_ema_train_step.1} parent=1 // pred_check
      _
    $region15: #{_ema_train_step.1} parent=1 // pred_check_branch
      %36 = sbr.rel (0) target = $region17
    $region16: #{_ema_train_step.1} parent=1 // pred_region
      %38 = dma.done [#allocation4], 16
    $region17: #{_ema_train_step.1} parent=1 // pred_fallthru
      _
    // Predicated region
    $region18: #{_ema_train_step.1} parent=1 // pred_check
      _
    $region19: #{_ema_train_step.1} parent=1 // pred_check_branch
      %40 = sbr.rel (0) target = $region21
    $region20: #{_ema_train_step.1} parent=1 // pred_region
      %42 = dma.done [#allocation6], 16
    $region21: #{_ema_train_step.1} parent=1 // pred_fallthru
      _
    %43 = sfence
    %s44 = sld [smem:[#allocation2]]
    %s45 = sld [smem:[#allocation2 + $0x3]]
    %s46 = sld [smem:[#allocation2 + $0x4]]
    %s47 = sld [smem:[#allocation2 + $0x5]]
    %s48 = sld [smem:[#allocation2 + $0x6]]
    %s49 = sld [smem:[#allocation2 + $0x7]]
    %v50 = vld [vmem:[%s2] sm:$0xff]
    %v51 = vld [vmem:[%s2 + $0x8] sm:$0xff]
    %v52 = vlaneseq
    %v53 = vshrl.u32 %v52, 7
    %v54 = vadd.s32 %v53, 8
    %v55 = vmul.u32 %v53, 128
    %v56 = vmul.u32 %v54, 128
    %v57 = vlaneseq
    %v58 = vand.u32 %v57, 127
    %v59 = vadd.s32 %v55, %v58
    %v60 = vadd.s32 %v56, %v58
    %s61 = sld [smem:[#allocation5]]
    %v62 = vstv %s61
    %vm63 = vcmp.lt.s32.totalorder %v59, %v62
    %vm64 = vcmp.lt.s32.totalorder %v60, %v62
    %v65 = vstv %s44
    %v66 = vsel %vm63, %v50, %v65
    %v67 = vsel %vm64, %v51, %v65
    %v68 = vsub.f32 %v66, %v65
    %v69 = vsub.f32 %v67, %v65
    %v70 = vadd.f32 %v68, %v69
    %v71 = vrot.slane %v70, 4
    %v72 = vadd.f32 %v70, %v71
    %v73 = vrot.slane %v72, 2
    %v74 = vadd.f32 %v72, %v73
    %v75 = vrot.slane %v74, 1
    %v76 = vadd.f32 %v74, %v75
    %77 = vadd.xlane.f32.xlu0 %v76
    %v78 = vpop.xlane.xlu0 %77
    %v79 = vmul.f32 %v68, %v68
    %v80 = vmul.f32 %v69, %v69
    %v81 = vadd.f32 %v79, %v80
    %v82 = vrot.slane %v81, 4
    %v83 = vadd.f32 %v81, %v82
    %v84 = vrot.slane %v83, 2
    %v85 = vadd.f32 %v83, %v84
    %v86 = vrot.slane %v85, 1
    %v87 = vadd.f32 %v85, %v86
    %88 = vadd.xlane.f32.xlu0 %v87
    %v89 = vpop.xlane.xlu0 %88
    %v90 = vstv %s49
    %v91 = vrcp.pop %v90
    %v92 = vmul.f32 %v90, %v91
    %v93 = vsub.f32 1.0, %v92
    %v94 = vmul.f32 %v91, %v93
    %v95 = vadd.f32 %v91, %v94
    %vm96 = vweird.f32 %v90
    %vm97 = vweird.f32 %v91
    %vm98 = vmor %vm96, %vm97
    %v99 = vsel %vm98, %v91, %v95
    %v100 = vand.u32 2147483647, %v90
    %vm101 = vcmp.eq.f32.partialorder %v100, 8.507059e+37
    %v102 = vand.u32 %v90, 2147483648
    %v103 = vor.u32 1.1754944e-38, %v102
    %v104 = vsel %vm101, %v103, %v99
    %v105 = vmul.f32 %v78, %v104
    %v106 = vadd.f32 %v65, %v105
    %s107 = sld [smem:[#allocation2 + $0x1]]
    %v108 = vstv %s107
    %v109 = vstv %s45
    %v110 = vmul.f32 %v108, %v109
    %v111 = vstv %s46
    %v112 = vmul.f32 %v106, %v111
    %v113 = vadd.f32 %v110, %v112
    %v114 = vstv %s47
    %v115 = vrcp.pop %v114
    %v116 = vmul.f32 %v114, %v115
    %v117 = vsub.f32 1.0, %v116
    %v118 = vmul.f32 %v115, %v117
    %v119 = vadd.f32 %v115, %v118
    %vm120 = vweird.f32 %v114
    %vm121 = vweird.f32 %v115
    %vm122 = vmor %vm120, %vm121
    %v123 = vsel %vm122, %v115, %v119
    %v124 = vand.u32 2147483647, %v114
    %vm125 = vcmp.eq.f32.partialorder %v124, 8.507059e+37
    %v126 = vand.u32 %v114, 2147483648
    %v127 = vor.u32 1.1754944e-38, %v126
    %v128 = vsel %vm125, %v127, %v123
    %v129 = vmul.f32 %v113, %v128
    %s130 = sld [smem:[#allocation5 + $0x1]]
    %p131 = scmp.eq.s32.totalorder %s130, 1
    %s132 = scalar_select %p131, 1, 0
    %v133 = vstv %s132
    %vm134 = vcmp.eq.s32.totalorder %v133, 1
    %v135 = vsel %vm134, %v129, %v65
    %v136 = vsub.f32 %v135, %v65
    %v137 = vsub.f32 %v129, %v65
    %v138 = vadd.f32 %v136, %v137
    %v139 = vmul.f32 %v138, %v78
    %v140 = vsub.f32 %v89, %v139
    %v141 = vmul.f32 %v136, %v137
    %v142 = vmul.f32 %v141, %v90
    %v143 = vadd.f32 %v140, %v142
    %v144 = vmul.f32 %v143, %v104
    %s145 = sld [smem:[#allocation2 + $0x2]]
    %v146 = vstv %s145
    %v147 = vmul.f32 %v146, %v109
    %v148 = vmul.f32 %v144, %v111
    %v149 = vadd.f32 %v147, %v148
    %v150 = vmul.f32 %v149, %v128
    %v151 = vstv %s48
    %v152 = vmax.f32 %v150, %v151
    %v153 = vrsqrt.pop %v152
    %v154 = vmul.f32 %v153, %v152
    %v155 = vmul.f32 %v154, %v153
    %v156 = vmul.f32 0.5, %v155
    %v157 = vsub.f32 1.5, %v156
    %v158 = vmul.f32 %v153, %v157
    %vm159 = vweird.f32 %v152
    %vm160 = vweird.f32 %v153
    %vm161 = vmor %vm159, %vm160
    %v162 = vsel %vm161, %v153, %v158
    %v163 = vmul.f32 %v129, %v162
    %v164 = vmul.f32 %v50, %v162
    %v165 = vmul.f32 %v51, %v162
    %v166 = vsub.f32 %v164, %v163
    %v167 = vsub.f32 %v165, %v163
    %168 = vst [vmem:[%s3] sm:$0xff] %v166
    %169 = vst [vmem:[%s3 + $0x8] sm:$0xff] %v167
    %vm170 = vcmask 0
    %171 = vst.msk [vmem:[#allocation7] sm:$0x1] %vm170, %v113
    %172 = vst.msk [vmem:[#allocation8] sm:$0x1] %vm170, %v149
    // Predicated region
    $region22: #{_ema_train_step.1} parent=1 // pred_check
      _
    $region23: #{_ema_train_step.1} parent=1 // pred_check_branch
      %174 = sbr.rel (0) target = $region25
    $region24: #{_ema_train_step.1} parent=1 // pred_region
      _
    $region25: #{_ema_train_step.1} parent=1 // pred_fallthru
      _
    // Predicated region
    $region26: #{_ema_train_step.1} parent=1 // pred_check
      _
    $region27: #{_ema_train_step.1} parent=1 // pred_check_branch
      %176 = sbr.rel (0) target = $region29
    $region28: #{_ema_train_step.1} parent=1 // pred_region
      %178 = vsyncadd [#allocation3], 0
      %s180 = sshll.u32 [#allocation7], 4
      %s181 = int_to_ptr.vmem [resolvable:$true] %s180
      %s182 = sshll.u32 %s4, 4
      %s183 = int_to_ptr.hbm [resolvable:$true] %s182
      %185 = dma.vmem_to_hbm [thread:$0]  %s181, 16, %s183, [#allocation3]
    $region29: #{_ema_train_step.1} parent=1 // pred_fallthru
      _
    // Predicated region
    $region30: #{_ema_train_step.1} parent=1 // pred_check
      _
    $region31: #{_ema_train_step.1} parent=1 // pred_check_branch
      %187 = sbr.rel (0) target = $region33
    $region32: #{_ema_train_step.1} parent=1 // pred_region
      %189 = vsyncadd [#allocation9], 0
      %s191 = sshll.u32 [#allocation8], 4
      %s192 = int_to_ptr.vmem [resolvable:$true] %s191
      %s193 = sshll.u32 %s5, 4
      %s194 = int_to_ptr.hbm [resolvable:$true] %s193
      %196 = dma.vmem_to_hbm [thread:$0]  %s192, 16, %s194, [#allocation9]
    $region33: #{_ema_train_step.1} parent=1 // pred_fallthru
      _
    // Predicated region
    $region34: #{_ema_train_step.1} parent=1 // pred_check
      _
    $region35: #{_ema_train_step.1} parent=1 // pred_check_branch
      %198 = sbr.rel (0) target = $region37
    $region36: #{_ema_train_step.1} parent=1 // pred_region
      _
    $region37: #{_ema_train_step.1} parent=1 // pred_fallthru
      _
    // Predicated region
    $region38: #{_ema_train_step.1} parent=1 // pred_check
      _
    $region39: #{_ema_train_step.1} parent=1 // pred_check_branch
      %200 = sbr.rel (0) target = $region41
    $region40: #{_ema_train_step.1} parent=1 // pred_region
      %202 = dma.done [#allocation3], 16
    $region41: #{_ema_train_step.1} parent=1 // pred_fallthru
      _
    // Predicated region
    $region42: #{_ema_train_step.1} parent=1 // pred_check
      _
    $region43: #{_ema_train_step.1} parent=1 // pred_check_branch
      %204 = sbr.rel (0) target = $region45
    $region44: #{_ema_train_step.1} parent=1 // pred_region
      %206 = dma.done [#allocation9], 16
    $region45: #{_ema_train_step.1} parent=1 // pred_fallthru
      _
    %207 = vsyncpa [#allocation3], 1
    %208 = vsyncpa [#allocation9], 1
    %209 = vsyncpa [#allocation4], 1
    %210 = vsyncpa [#allocation6], 1

</llo_original>
